<compile_context>
chip_gen: v5e
topology: v5e:2x2
jax: 0.10.0
libtpu: 0.0.40
codegen_flags: <defaults>
</compile_context>

<pallas_src>
import math

import jax
import jax.numpy as jnp
from jax.experimental import pallas as pl
from jax.experimental.pallas import tpu as pltpu


def _round_up(x, m):
    return (x + m - 1) // m * m


def _vmem_limit_bytes():
    """Generation-aware scoped-VMEM request (v7x has only 64 MiB per TC)."""
    try:
        kind = jax.devices()[0].device_kind.lower()
    except Exception:
        kind = ""
    if "v7" in kind:
        return 48 << 20
    if any(v in kind for v in ("v4", "v5", "v6")):
        return 96 << 20
    return None  # unknown chip: keep the compiler default


# ---------------------------------------------------------------------------
# Kernel 1: support = x @ W    (feature transform, row-tiled, fully parallel)
# ---------------------------------------------------------------------------
def support_kernel(x_ref, w_ref, out_ref):
    out_ref[...] = jnp.dot(
        x_ref[...], w_ref[...], preferred_element_type=jnp.float32
    ).astype(out_ref.dtype)


# ---------------------------------------------------------------------------
# Kernel 2a: out = adj @ support + bias   (full-K per row block, no scratch)
# ---------------------------------------------------------------------------
def aggregate_fullk_kernel(adj_ref, s_ref, b_ref, out_ref):
    out_ref[...] = (
        jnp.dot(adj_ref[...], s_ref[...], preferred_element_type=jnp.float32)
        + b_ref[...]
    ).astype(out_ref.dtype)


# ---------------------------------------------------------------------------
# Kernel 2b: out = adj @ support + bias   (K-tiled fallback, f32 accumulator)
# ---------------------------------------------------------------------------
def aggregate_ktiled_kernel(adj_ref, s_ref, b_ref, out_ref, acc_ref):
    k = pl.program_id(1)

    @pl.when(k == 0)
    def _():
        acc_ref[...] = jnp.zeros_like(acc_ref)

    acc_ref[...] += jnp.dot(
        adj_ref[...], s_ref[...], preferred_element_type=jnp.float32
    )

    @pl.when(k == pl.num_programs(1) - 1)
    def _():
        out_ref[...] = (acc_ref[...] + b_ref[...]).astype(out_ref.dtype)


def graph_convolution(x, adj, weight, bias=None, *,
                      block_rows=512, block_k=2048):
    N, f_in = x.shape
    f_in_w, f_out = weight.shape
    assert f_in_w == f_in
    assert adj.shape == (N, N)
    out_dtype = x.dtype
    f32 = jnp.float32
    ebytes = 4  # f32 throughout (matches PyTorch layer semantics)

    # ---- lane-dense feature dims (pad to multiples of 128) -----------------
    f_out_p = _round_up(max(f_out, 128), 128)
    f_in_p = _round_up(max(f_in, 128), 128)

    vmem_limit = _vmem_limit_bytes()
    budget = int((vmem_limit if vmem_limit is not None else (24 << 20)) * 0.6)
    vmem_kw = {"vmem_limit_bytes": vmem_limit} if vmem_limit is not None else {}

    # ---- row block: >= 2 blocks when N allows (v7x megacore sharding) ------
    n8 = _round_up(N, 8)
    br = min(block_rows, n8)
    if n8 >= 16:
        br = min(br, _round_up((n8 + 1) // 2, 8))
    br = _round_up(br, 8)

    # ---- choose aggregation strategy ---------------------------------------
    # Variant A (preferred): adj block (br, n_pad), whole support resident.
    n_pad_a = _round_up(N, br)
    fullk_need = (2 * br * n_pad_a          # adj row slab, double-buffered
                  + 2 * n_pad_a * f_out_p   # support (resident, counted x2)
                  + 2 * br * f_out_p        # output, double-buffered
                  + 2 * f_out_p) * ebytes   # bias
    use_fullk = fullk_need <= budget

    if use_fullk:
        n_pad = n_pad_a
        bk = n_pad
        support_resident = True
    else:
        # Variant B: K-tiled with large tiles; bk a multiple of br so padding
        # is a single multiple (no lcm blow-up).
        bk = min(block_k, _round_up(N, 128))
        bk = max(br, (bk // br) * br)
        while True:
            n_pad = _round_up(N, bk)
            support_resident = (2 * n_pad * f_out_p * ebytes) <= budget // 2
            s_bytes = (2 * n_pad * f_out_p) if support_resident else (2 * bk * f_out_p)
            need = (3 * br * bk              # adj tile, triple-buffered
                    + s_bytes                # support (resident or slab)
                    + 2 * br * f_out_p       # output
                    + br * f_out_p           # f32 accumulator scratch
                    + 2 * f_out_p) * ebytes  # bias
            if need <= budget or bk <= br:
                break
            bk = max(br, ((bk // 2) // br) * br)

    # ---- pad operands (zero padding keeps the math exact) ------------------
    xp = x.astype(f32)
    ap = adj.astype(f32)   # no-op for f32 input: adj is streamed once, as-is
    wp = weight.astype(f32)
    if bias is None:
        bp = jnp.zeros((f_out_p,), f32)
    else:
        bp = bias.astype(f32)
        if f_out_p != f_out:
            bp = jnp.pad(bp, (0, f_out_p - f_out))
    bp = bp.reshape(1, f_out_p)

    if n_pad != N or f_in_p != f_in:
        xp = jnp.pad(xp, ((0, n_pad - N), (0, f_in_p - f_in)))
    if n_pad != N:
        ap = jnp.pad(ap, ((0, n_pad - N), (0, n_pad - N)))
    if f_in_p != f_in or f_out_p != f_out:
        wp = jnp.pad(wp, ((0, f_in_p - f_in), (0, f_out_p - f_out)))

    # ---- support = x @ W ----------------------------------------------------
    support = pl.pallas_call(
        support_kernel,
        out_shape=jax.ShapeDtypeStruct((n_pad, f_out_p), f32),
        grid_spec=pltpu.PrefetchScalarGridSpec(
            num_scalar_prefetch=0,
            grid=(n_pad // br,),
            in_specs=[
                pl.BlockSpec((br, f_in_p), lambda i: (i, 0)),      # x row block
                pl.BlockSpec((f_in_p, f_out_p), lambda i: (0, 0)),  # full weight
            ],
            out_specs=pl.BlockSpec((br, f_out_p), lambda i: (i, 0)),
        ),
        compiler_params=pltpu.CompilerParams(
            dimension_semantics=("parallel",), **vmem_kw),
        cost_estimate=pl.CostEstimate(
            flops=2 * n_pad * f_in_p * f_out_p,
            transcendentals=0,
            bytes_accessed=(n_pad * f_in_p + f_in_p * f_out_p
                            + n_pad * f_out_p) * ebytes,
        ),
    )(xp, wp)

    # ---- out = adj @ support + bias -----------------------------------------
    if use_fullk:
        out = pl.pallas_call(
            aggregate_fullk_kernel,
            out_shape=jax.ShapeDtypeStruct((n_pad, f_out_p), out_dtype),
            grid_spec=pltpu.PrefetchScalarGridSpec(
                num_scalar_prefetch=0,
                grid=(n_pad // br,),
                in_specs=[
                    pl.BlockSpec((br, n_pad), lambda i: (i, 0)),      # adj rows
                    pl.BlockSpec((n_pad, f_out_p), lambda i: (0, 0)),  # support (resident)
                    pl.BlockSpec((1, f_out_p), lambda i: (0, 0)),      # bias
                ],
                out_specs=pl.BlockSpec((br, f_out_p), lambda i: (i, 0)),
            ),
            compiler_params=pltpu.CompilerParams(
                dimension_semantics=("parallel",), **vmem_kw),
            cost_estimate=pl.CostEstimate(
                flops=2 * n_pad * n_pad * f_out_p,
                transcendentals=0,
                bytes_accessed=(n_pad * n_pad + n_pad * f_out_p
                                + n_pad * f_out_p + f_out_p) * ebytes,
            ),
        )(ap, support, bp)
    else:
        if support_resident:
            s_spec = pl.BlockSpec((n_pad, f_out_p), lambda i, k: (0, 0))
            s_traffic = n_pad * f_out_p
        else:
            s_spec = pl.BlockSpec((bk, f_out_p), lambda i, k: (k, 0))
            s_traffic = (n_pad // br) * n_pad * f_out_p
        out = pl.pallas_call(
            aggregate_ktiled_kernel,
            out_shape=jax.ShapeDtypeStruct((n_pad, f_out_p), out_dtype),
            grid_spec=pltpu.PrefetchScalarGridSpec(
                num_scalar_prefetch=0,
                grid=(n_pad // br, n_pad // bk),
                in_specs=[
                    pl.BlockSpec((br, bk), lambda i, k: (i, k),
                                 pipeline_mode=pl.Buffered(3)),  # adj tile
                    s_spec,                                       # support
                    pl.BlockSpec((1, f_out_p), lambda i, k: (0, 0)),  # bias
                ],
                out_specs=pl.BlockSpec((br, f_out_p), lambda i, k: (i, 0)),
                scratch_shapes=[pltpu.VMEM((br, f_out_p), jnp.float32)],
            ),
            compiler_params=pltpu.CompilerParams(
                dimension_semantics=("parallel", "arbitrary"), **vmem_kw),
            cost_estimate=pl.CostEstimate(
                flops=2 * n_pad * n_pad * f_out_p,
                transcendentals=0,
                bytes_accessed=(n_pad * n_pad + s_traffic
                                + n_pad * f_out_p + f_out_p) * ebytes,
            ),
        )(ap, support, bp)

    return out[:N, :f_out]


if __name__ == "__main__":
    # Small deterministic problem: N nodes, in_features -> out_features.
    N, in_features, out_features = 128, 64, 128

    key = jax.random.PRNGKey(0)
    k_x, k_adj, k_w, k_b = jax.random.split(key, 4)

    x = jax.random.normal(k_x, (N, in_features), dtype=jnp.float32)

    # Dense row-normalized adjacency with self loops (torch.spmm on a dense adj
    # is an ordinary matmul).  TODO(synk): no sparse (CSR) gather kernel; adj is dense.
    a = (jax.random.uniform(k_adj, (N, N)) < 0.1).astype(jnp.float32)
    a = jnp.maximum(a, a.T) + jnp.eye(N, dtype=jnp.float32)
    adj = a / jnp.sum(a, axis=1, keepdims=True)

    # Parameter init matching reset_parameters(): U(-stdv, stdv), stdv = 1/sqrt(out).
    stdv = 1.0 / math.sqrt(out_features)
    weight = jax.random.uniform(
        k_w, (in_features, out_features), minval=-stdv, maxval=stdv, dtype=jnp.float32
    )
    bias = jax.random.uniform(
        k_b, (out_features,), minval=-stdv, maxval=stdv, dtype=jnp.float32
    )

    out = jax.block_until_ready(graph_convolution(x, adj, weight, bias))
    assert out.shape == (N, out_features)
    assert out.dtype == x.dtype

    # Full f32 semantic reference (the kernel now runs entirely in f32).
    ref = adj @ (x @ weight) + bias[None, :]
    assert jnp.allclose(out, ref, atol=1e-2, rtol=1e-2), "mismatch vs f32 reference"

    print("KERNEL_OK")
</pallas_src>

<mosaic_0001>
module attributes {stable_mosaic.version = 11 : i64} {
  func.func @support_kernel(%arg0: i32, %arg1: memref<64x128xf32, #tpu.memory_space<vmem>>, %arg2: memref<128x128xf32, #tpu.memory_space<vmem>>, %arg3: memref<64x128xf32, #tpu.memory_space<vmem>>) attributes {dimension_semantics = [#tpu.dimension_semantics<parallel>], iteration_bounds = array<i64: 2>, scalar_prefetch = 0 : i64, scratch_operands = 0 : i64, tpu.core_type = #tpu.core_type<tc>, window_params = [{transform_indices = @transform_0, window_bounds = array<i64: 64, 128>}, {pipeline_mode = #tpu.pipeline_mode<synchronous>, transform_indices = @transform_1, window_bounds = array<i64: 128, 128>}, {transform_indices = @transform_2, window_bounds = array<i64: 64, 128>}]} {
    %c0 = arith.constant 0 : index
    %c0_0 = arith.constant 0 : index
    %0 = vector.load %arg1[%c0, %c0_0] : memref<64x128xf32, #tpu.memory_space<vmem>>, vector<64x128xf32>
    %c0_1 = arith.constant 0 : index
    %c0_2 = arith.constant 0 : index
    %1 = vector.load %arg2[%c0_1, %c0_2] : memref<128x128xf32, #tpu.memory_space<vmem>>, vector<128x128xf32>
    %cst = arith.constant dense<0.000000e+00> : vector<64x128xf32>
    %2 = tpu.matmul %0, %1, %cst {dimension_numbers = #tpu.dot_dimension_numbers<[1], [0], [0], [1], [0, 0, 1, 1], [], []>} : vector<64x128xf32>, vector<128x128xf32>, vector<64x128xf32> -> vector<64x128xf32>
    %c0_3 = arith.constant 0 : index
    %c0_4 = arith.constant 0 : index
    %3 = vector.load %arg3[%c0_3, %c0_4] : memref<64x128xf32, #tpu.memory_space<vmem>>, vector<64x128xf32>
    tpu.vector_store %arg3[%c0_3, %c0_4], %2 {strides = array<i32>} : memref<64x128xf32, #tpu.memory_space<vmem>>, vector<64x128xf32>,
    return
  }
  func.func @transform_0(%arg0: i32) -> (i32, i32) {
    %c0_i32 = arith.constant 0 : i32
    %c0_i32_0 = arith.constant 0 : i32
    return %arg0, %c0_i32 : i32, i32
  }
  func.func @transform_1(%arg0: i32) -> (i32, i32) {
    %c0_i32 = arith.constant 0 : i32
    %c0_i32_0 = arith.constant 0 : i32
    %c0_i32_1 = arith.constant 0 : i32
    return %c0_i32, %c0_i32_0 : i32, i32
  }
  func.func @transform_2(%arg0: i32) -> (i32, i32) {
    %c0_i32 = arith.constant 0 : i32
    %c0_i32_0 = arith.constant 0 : i32
    return %arg0, %c0_i32 : i32, i32
  }
}

</mosaic_0001>

<llo_original>
// kernel: tpu_custom_call.1
$region0: #{tpu_custom_call.1}
  #allocation0 [shape = 'u32[]', space=smem, size = 0x4, offset = 0x4, fixed_abs, tag = 'smem constant byte address 0x4 - core index']
  #allocation1 [shape = 'u32[72,128]{1,0:T(1,128)}', space=vmem, size = 0x9000, scoped, tag = 'internal scratch']
  %s0 = inlined_call_operand.hbm [shape: f32[128,128], index: 0, kind: input, shape index: {}]
  %s1 = inlined_call_operand.hbm [shape: f32[128,128], index: 1, kind: input, shape index: {}]
  %s2 = inlined_call_operand.hbm [shape: f32[128,128], index: 2, kind: output, shape index: {}]
  %s3 = sld [smem:[#allocation0]]
  $region49: #{tpu_custom_call.1} parent=0
    _
  %s5 = ssub.s32 1, %s3
  %s6 = scalar_select 0, %s5, %s3
  $region1: #{tpu_custom_call.1} parent=0
    #allocation2 [shape = 'u8[65536]{0}', space=vmem, size = 0x10000, scoped, tag = 'input window, operand 0']
    #allocation3 [shape = 's32[2]{0}', space=sflag, size = 0x8, scoped, tag = 'scoped memory for tpu_custom_call.1']
    #allocation4 [shape = 's32[2]{0}', space=sflag, size = 0x8, scoped, tag = 'scoped memory for tpu_custom_call.1']
    #allocation5 [shape = 'u8[65536]{0}', space=vmem, size = 0x10000, scoped, tag = 'input window, operand 1, single buffered']
    #allocation6 [shape = 's32[1]{0}', space=sflag, size = 0x4, scoped, tag = 'scoped memory for tpu_custom_call.1']
    #allocation7 [shape = 'u8[65536]{0}', space=vmem, size = 0x10000, scoped, tag = 'output window, operand 0']
    %7 = vsyncpa [#allocation3], 0
    %s8 = scalar_lea.sflag [#allocation3], 1
    %9 = vsyncpa %s8, 0
    %10 = vsyncpa [#allocation6], 0
    %11 = vsyncpa [#allocation4], 0
    %s12 = scalar_lea.sflag [#allocation4], 1
    %13 = vsyncpa %s12, 0
    loop: start=0, step=1, limit=4
    $region2: #{tpu_custom_call.1} parent=1 // loop_pre_header
      _
    $region3: #{tpu_custom_call.1} parent=1 // loop_header
      %s15 = sphi 0, %s19
      %p16 = scmp.ge.s32.totalorder %s15, 4
      %s25 = sphi 0, %s27
      %s28 = sphi 0, %s25
      %s29 = sphi 0, %s28
      %s45 = sphi 0, %s29
      %s49 = sphi 0, %s49
      %s51 = sphi 0, %s49
      %s52 = sphi 0, %s51
      %s66 = sphi 0, %s52
      %s72 = sphi 0, %s74
      %s75 = sphi 0, %s72
      %s76 = sphi 0, %s75
      %s92 = sphi 0, %s76
    $region4: #{tpu_custom_call.1} parent=1 // loop_header_branch
      %18 = sbr.rel (%p16) target = $region8
    $region5: #{tpu_custom_call.1} parent=1 // loop_body
      %s20 = ssub.s32 %s15, 1
      %s21 = ssub.s32 %s15, 2
      %s22 = sadd.s32 %s15, 1
      %s23 = ssub.s32 %s15, %s22
      %p24 = scmp.eq.s32.totalorder %s23, 0
      %s26 = sadd.s32 %s25, 1
      %s27 = scalar_select %p24, %s25, %s26
      %p30 = pneg %p24
      %p31 = scmp.eq.s32.totalorder %s15, 1
      %p32 = por %p30, %p31
      %p33 = scmp.ne.s32.totalorder %s25, %s28
      %p34 = scmp.eq.s32.totalorder %s15, 0
      %p35 = por %p33, %p34
      %p36 = scmp.ne.s32.totalorder %s25, %s28
      %p37 = scmp.eq.s32.totalorder %s20, 1
      %p38 = por %p36, %p37
      %p39 = scmp.ne.s32.totalorder %s28, %s29
      %p40 = scmp.eq.s32.totalorder %s20, 0
      %p41 = por %p39, %p40
      %p42 = scmp.ne.s32.totalorder %s28, %s29
      %p43 = scmp.eq.s32.totalorder %s21, 1
      %p44 = por %p42, %p43
      %p46 = scmp.ne.s32.totalorder %s29, %s45
      %p47 = scmp.eq.s32.totalorder %s21, 0
      %p48 = por %p46, %p47
      %s50 = sadd.s32 %s49, 1
      %p53 = scmp.eq.s32.totalorder %s15, 1
      %p54 = scmp.ne.s32.totalorder %s49, %s51
      %p55 = scmp.eq.s32.totalorder %s15, 0
      %p56 = por %p54, %p55
      %p57 = scmp.ne.s32.totalorder %s49, %s51
      %p58 = scmp.eq.s32.totalorder %s20, 1
      %p59 = por %p57, %p58
      %p60 = scmp.ne.s32.totalorder %s51, %s52
      %p61 = scmp.eq.s32.totalorder %s20, 0
      %p62 = por %p60, %p61
      %p63 = scmp.ne.s32.totalorder %s51, %s52
      %p64 = scmp.eq.s32.totalorder %s21, 1
      %p65 = por %p63, %p64
      %p67 = scmp.ne.s32.totalorder %s52, %s66
      %p68 = scmp.eq.s32.totalorder %s21, 0
      %p69 = por %p67, %p68
      %s70 = ssub.s32 %s15, %s22
      %p71 = scmp.eq.s32.totalorder %s70, 0
      %s73 = sadd.s32 %s72, 1
      %s74 = scalar_select %p71, %s72, %s73
      %p77 = pneg %p71
      %p78 = scmp.eq.s32.totalorder %s15, 1
      %p79 = por %p77, %p78
      %p80 = scmp.ne.s32.totalorder %s72, %s75
      %p81 = scmp.eq.s32.totalorder %s15, 0
      %p82 = por %p80, %p81
      %p83 = scmp.ne.s32.totalorder %s72, %s75
      %p84 = scmp.eq.s32.totalorder %s20, 1
      %p85 = por %p83, %p84
      %p86 = scmp.ne.s32.totalorder %s75, %s76
      %p87 = scmp.eq.s32.totalorder %s20, 0
      %p88 = por %p86, %p87
      %p89 = scmp.ne.s32.totalorder %s75, %s76
      %p90 = scmp.eq.s32.totalorder %s21, 1
      %p91 = por %p89, %p90
      %p93 = scmp.ne.s32.totalorder %s76, %s92
      %p94 = scmp.eq.s32.totalorder %s21, 0
      %p95 = por %p93, %p94
      %p96 = scmp.le.s32.totalorder 1, %s15
      %p97 = scmp.lt.s32.totalorder %s15, 3
      %p98 = pnand %p96, %p97
      %p99 = pneg %p98
      // Predicated region
      $region9: #{tpu_custom_call.1} parent=5 // pred_check
        _
      $region10: #{tpu_custom_call.1} parent=5 // pred_check_branch
        %101 = sbr.rel (%p98) target = $region12
      $region11: #{tpu_custom_call.1} parent=5 // pred_region
        %s102 = ssub.s32 %s15, 1
        // Predicated region
        $region13: #{tpu_custom_call.1} parent=11 // pred_check
          %p103 = pneg %p62
        $region14: #{tpu_custom_call.1} parent=11 // pred_check_branch
          %105 = sbr.rel (%p103) target = $region16
        $region15: #{tpu_custom_call.1} parent=11 // pred_region
          %107 = vsyncadd [#allocation6], 0
          %s108 = sshll.u32 %s1, 4
          %s109 = int_to_ptr.hbm [resolvable:$true] %s108
          %s110 = sshll.u32 [#allocation5], 4
          %s111 = int_to_ptr.vmem [resolvable:$true] %s110
          %116 = dma.hbm_to_vmem [thread:$0]  %s109, 2048, %s111, [#allocation6], 128, 128, 8
        $region16: #{tpu_custom_call.1} parent=11 // pred_fallthru
          _
      $region12: #{tpu_custom_call.1} parent=5 // pred_fallthru
        _
      %p117 = scmp.lt.s32.totalorder %s15, 2
      // Predicated region
      $region17: #{tpu_custom_call.1} parent=5 // pred_check
        %p118 = pneg %p117
      $region18: #{tpu_custom_call.1} parent=5 // pred_check_branch
        %120 = sbr.rel (%p118) target = $region20
      $region19: #{tpu_custom_call.1} parent=5 // pred_region
        // Predicated region
        $region21: #{tpu_custom_call.1} parent=19 // pred_check
          %p121 = pneg %p35
        $region22: #{tpu_custom_call.1} parent=19 // pred_check_branch
          %123 = sbr.rel (%p121) target = $region24
        $region23: #{tpu_custom_call.1} parent=19 // pred_region
          %s124 = sand.u32 %s25, 1
          %s125 = scalar_lea.sflag [#allocation3], %s124
          %s126 = sand.u32 %s25, 1
          %s127 = smul.addr %s126, 64
          %s128 = scalar_lea.vmem [#allocation2], %s127
          %s129 = smul.u32 8, %s15
          %131 = vsyncadd %s125, 0
          %s132 = smul.addr %s129, 8
          %s133 = scalar_lea.hbm %s0, %s132
          %s134 = sshll.u32 %s133, 4
          %s135 = int_to_ptr.hbm [resolvable:$true] %s134
          %s136 = sshll.u32 %s128, 4
          %s137 = int_to_ptr.vmem [resolvable:$true] %s136
          %142 = dma.hbm_to_vmem [thread:$0]  %s135, 1024, %s137, %s125, 128, 128, 8
        $region24: #{tpu_custom_call.1} parent=19 // pred_fallthru
          _
      $region20: #{tpu_custom_call.1} parent=5 // pred_fallthru
        _
      %p143 = scmp.le.s32.totalorder 1, %s15
      %p144 = scmp.lt.s32.totalorder %s15, 3
      %p145 = pnand %p143, %p144
      %p146 = pneg %p145
      // Predicated region
      $region25: #{tpu_custom_call.1} parent=5 // pred_check
        _
      $region26: #{tpu_custom_call.1} parent=5 // pred_check_branch
        %148 = sbr.rel (%p145) target = $region28
      $region27: #{tpu_custom_call.1} parent=5 // pred_region
        %s149 = ssub.s32 %s15, 1
        %s150 = sand.u32 %s28, 1
        %s151 = scalar_lea.sflag [#allocation3], %s150
        %s152 = sand.u32 %s28, 1
        %s153 = smul.addr %s152, 64
        %s154 = scalar_lea.vmem [#allocation2], %s153
        // Predicated region
        $region29: #{tpu_custom_call.1} parent=27 // pred_check
          %p155 = pneg %p41
        $region30: #{tpu_custom_call.1} parent=27 // pred_check_branch
          %157 = sbr.rel (%p155) target = $region32
        $region31: #{tpu_custom_call.1} parent=27 // pred_region
          %159 = dma.done %s151, 1024
        $region32: #{tpu_custom_call.1} parent=27 // pred_fallthru
          _
        // Predicated region
        $region33: #{tpu_custom_call.1} parent=27 // pred_check
          %p160 = pneg %p62
        $region34: #{tpu_custom_call.1} parent=27 // pred_check_branch
          %162 = sbr.rel (%p160) target = $region36
        $region35: #{tpu_custom_call.1} parent=27 // pred_region
          %164 = dma.done [#allocation6], 2048
        $region36: #{tpu_custom_call.1} parent=27 // pred_fallthru
          _
        %s165 = sand.u32 %s28, 1
        %s166 = scalar_lea.sflag [#allocation3], %s165
        %s167 = sand.u32 %s28, 1
        %s168 = smul.addr %s167, 64
        %s169 = scalar_lea.vmem [#allocation2], %s168
        %p170 = pneg %p41
        %p171 = pneg %p38
        %p172 = pneg %p62
        %p173 = pneg %p59
        %p174 = pneg %p88
        %p175 = pneg %p85
        %s176 = sand.u32 %s75, 1
        %s177 = scalar_lea.sflag [#allocation4], %s176
        %s178 = sand.u32 %s75, 1
        %s179 = smul.addr %s178, 64
        %s180 = scalar_lea.vmem [#allocation7], %s179
        %s181 = smul.u32 8, %s20
        %s182 = smul.u32 8, %s20
        %v183 = vld [vmem:[%s154] sm:$0xff]
        %v184 = vld [vmem:[%s154 + $0x8] sm:$0xff]
        %v185 = vld [vmem:[%s154 + $0x10] sm:$0xff]
        %v186 = vld [vmem:[%s154 + $0x18] sm:$0xff]
        %v187 = vld [vmem:[%s154 + $0x20] sm:$0xff]
        %v188 = vld [vmem:[%s154 + $0x28] sm:$0xff]
        %v189 = vld [vmem:[%s154 + $0x30] sm:$0xff]
        %v190 = vld [vmem:[%s154 + $0x38] sm:$0xff]
        %v191 = vld [vmem:[#allocation5] sm:$0xff]
        %v192 = vld [vmem:[#allocation5 + $0x8] sm:$0xff]
        %v193 = vld [vmem:[#allocation5 + $0x10] sm:$0xff]
        %v194 = vld [vmem:[#allocation5 + $0x18] sm:$0xff]
        %v195 = vld [vmem:[#allocation5 + $0x20] sm:$0xff]
        %v196 = vld [vmem:[#allocation5 + $0x28] sm:$0xff]
        %v197 = vld [vmem:[#allocation5 + $0x30] sm:$0xff]
        %v198 = vld [vmem:[#allocation5 + $0x38] sm:$0xff]
        %v199 = vld [vmem:[#allocation5 + $0x40] sm:$0xff]
        %v200 = vld [vmem:[#allocation5 + $0x48] sm:$0xff]
        %v201 = vld [vmem:[#allocation5 + $0x50] sm:$0xff]
        %v202 = vld [vmem:[#allocation5 + $0x58] sm:$0xff]
        %v203 = vld [vmem:[#allocation5 + $0x60] sm:$0xff]
        %v204 = vld [vmem:[#allocation5 + $0x68] sm:$0xff]
        %v205 = vld [vmem:[#allocation5 + $0x70] sm:$0xff]
        %v206 = vld [vmem:[#allocation5 + $0x78] sm:$0xff]
        %207 = vmatpush.msra.mxu0 %v206
        %208 = vmatpush.msra.mxu0 %v205
        %209 = vmatpush.msra.mxu0 %v204
        %210 = vmatpush.msra.mxu0 %v203
        %211 = vmatpush.msra.mxu0 %v202
        %212 = vmatpush.msra.mxu0 %v201
        %213 = vmatpush.msra.mxu0 %v200
        %214 = vmatpush.msra.mxu0 %v199
        %215 = vmatpush.msra.mxu0 %v198
        %216 = vmatpush.msra.mxu0 %v197
        %217 = vmatpush.msra.mxu0 %v196
        %218 = vmatpush.msra.mxu0 %v195
        %219 = vmatpush.msra.mxu0 %v194
        %220 = vmatpush.msra.mxu0 %v193
        %221 = vmatpush.msra.mxu0 %v192
        %222 = vmatpush.msra.mxu0 %v191
        %223 = vmatmul.f32.gmra.mxu0 %v183
        %v224 = vpop.f32.mrf.mxu0
        %v225 = vadd.f32 0.0, %v224
        %226 = vmatmul.f32.gmra.mxu0 %v184
        %v227 = vpop.f32.mrf.mxu0
        %v228 = vadd.f32 0.0, %v227
        %229 = vmatmul.f32.gmra.mxu0 %v185
        %v230 = vpop.f32.mrf.mxu0
        %v231 = vadd.f32 0.0, %v230
        %232 = vmatmul.f32.gmra.mxu0 %v186
        %v233 = vpop.f32.mrf.mxu0
        %v234 = vadd.f32 0.0, %v233
        %235 = vmatmul.f32.gmra.mxu0 %v187
        %v236 = vpop.f32.mrf.mxu0
        %v237 = vadd.f32 0.0, %v236
        %238 = vmatmul.f32.gmra.mxu0 %v188
        %v239 = vpop.f32.mrf.mxu0
        %v240 = vadd.f32 0.0, %v239
        %241 = vmatmul.f32.gmra.mxu0 %v189
        %v242 = vpop.f32.mrf.mxu0
        %v243 = vadd.f32 0.0, %v242
        %244 = vmatmul.f32.gmra.mxu0 %v190
        %v245 = vpop.f32.mrf.mxu0
        %v246 = vadd.f32 0.0, %v245
        %247 = vdwg.mxu0
        %248 = vst [vmem:[%s180] sm:$0xff] %v225
        %249 = vst [vmem:[%s180 + $0x8] sm:$0xff] %v228
        %250 = vst [vmem:[%s180 + $0x10] sm:$0xff] %v231
        %251 = vst [vmem:[%s180 + $0x18] sm:$0xff] %v234
        %252 = vst [vmem:[%s180 + $0x20] sm:$0xff] %v237
        %253 = vst [vmem:[%s180 + $0x28] sm:$0xff] %v240
        %254 = vst [vmem:[%s180 + $0x30] sm:$0xff] %v243
        %255 = vst [vmem:[%s180 + $0x38] sm:$0xff] %v246
        %s256 = sand.u32 %s75, 1
        %s257 = scalar_lea.sflag [#allocation4], %s256
        %s258 = sand.u32 %s75, 1
        %s259 = smul.addr %s258, 64
        %s260 = scalar_lea.vmem [#allocation7], %s259
        // Predicated region
        $region37: #{tpu_custom_call.1} parent=27 // pred_check
          %p261 = pneg %p85
        $region38: #{tpu_custom_call.1} parent=27 // pred_check_branch
          %263 = sbr.rel (%p261) target = $region40
        $region39: #{tpu_custom_call.1} parent=27 // pred_region
          %s264 = smul.u32 8, %s20
          %266 = vsyncadd %s257, 0
          %s267 = smul.addr %s264, 8
          %s268 = scalar_lea.hbm %s2, %s267
          %s269 = sshll.u32 %s260, 4
          %s270 = int_to_ptr.vmem [resolvable:$true] %s269
          %s271 = sshll.u32 %s268, 4
          %s272 = int_to_ptr.hbm [resolvable:$true] %s271
          %277 = dma.vmem_to_hbm [thread:$0]  %s270, 1024, %s272, %s257, 128, 128, 8
        $region40: #{tpu_custom_call.1} parent=27 // pred_fallthru
          _
      $region28: #{tpu_custom_call.1} parent=5 // pred_fallthru
        _
      %p278 = scmp.le.s32.totalorder 2, %s15
      // Predicated region
      $region41: #{tpu_custom_call.1} parent=5 // pred_check
        %p279 = pneg %p278
      $region42: #{tpu_custom_call.1} parent=5 // pred_check_branch
        %281 = sbr.rel (%p279) target = $region44
      $region43: #{tpu_custom_call.1} parent=5 // pred_region
        %s282 = ssub.s32 %s15, 2
        // Predicated region
        $region45: #{tpu_custom_call.1} parent=43 // pred_check
          %p283 = pneg %p91
        $region46: #{tpu_custom_call.1} parent=43 // pred_check_branch
          %285 = sbr.rel (%p283) target = $region48
        $region47: #{tpu_custom_call.1} parent=43 // pred_region
          %s286 = sand.u32 %s76, 1
          %s287 = scalar_lea.sflag [#allocation4], %s286
          %s288 = sand.u32 %s76, 1
          %s289 = smul.addr %s288, 64
          %s290 = scalar_lea.vmem [#allocation7], %s289
          %292 = dma.done %s287, 1024
        $region48: #{tpu_custom_call.1} parent=43 // pred_fallthru
          _
      $region44: #{tpu_custom_call.1} parent=5 // pred_fallthru
        _
    $region6: #{tpu_custom_call.1} parent=1 // loop_footer
      %s19 = sadd.s32 1, %s15
    $region7: #{tpu_custom_call.1} parent=1 // loop_footer_branch
      %14 = sbr.rel target = $region3
    $region8: #{tpu_custom_call.1} parent=1 // loop_exit
      _
    %293 = vsyncpa [#allocation3], 1
    %s294 = scalar_lea.sflag [#allocation3], 1
    %295 = vsyncpa %s294, 1
    %296 = vsyncpa [#allocation6], 1
    %297 = vsyncpa [#allocation4], 1
    %s298 = scalar_lea.sflag [#allocation4], 1
    %299 = vsyncpa %s298, 1

</llo_original>
